<compile_context>
chip_gen: v5e
topology: v5e:2x2
jax: 0.10.0
libtpu: 0.0.40
codegen_flags: <defaults>
</compile_context>

<pallas_src>
import jax
import jax.numpy as jnp
from jax.experimental import pallas as pl
from jax.experimental.pallas import tpu as pltpu


def attn_kernel(x_ref, w_ref, out_ref):
    # x_ref: (tb, L, H) VMEM block, w_ref: (1, 1, H) f32 weight row (VMEM).
    xt = jnp.tanh(x_ref[...])                       # tanh in the input dtype (EUP)

    # Linear(H, 1) (bias dropped: softmax-invariant) as a VPU broadcast-multiply
    # followed by an XLU lane reduce over H. Multiply promotes to f32.
    s = jnp.sum(xt * w_ref[...], axis=-1)           # (tb, L), f32

    # Numerically-stable softmax over the max_len axis (PyTorch dim=1).
    m = jnp.max(s, axis=1, keepdims=True)           # (tb, 1)
    e = jnp.exp(s - m)                               # (tb, L)
    denom = jnp.sum(e, axis=1, keepdims=True)        # (tb, 1)
    # Exact reciprocal: denom is only (tb, 1) values, cost is negligible in a
    # DMA-bound kernel, and rows sum to 1 within float rounding.
    out_ref[...] = (e * pl.reciprocal(denom, approx=False)).astype(out_ref.dtype)


def attn_forward(x, w, b=None, *, block_b=None):
    """x: (B, L, H), w: (1, H), b: ignored (softmax-invariant) -> alpha: (B, 1, L)."""
    del b  # Linear(H,1) bias is constant over L; softmax(s + b) == softmax(s).
    B, L, H = x.shape
    itemsize = x.dtype.itemsize
    w_row = w.reshape(1, 1, H).astype(jnp.float32)   # broadcast row for VPU multiply

    sub = 16 if itemsize == 2 else 8                 # sublane packing (bf16 vs f32)
    if block_b is None:
        # Target ~8 MiB of x per block: large enough that the ~0.35 us per-step
        # overhead is negligible against the block stream time on all of
        # v5e/v6e/v7x, small enough (x2 double-buffer + f32-ish temporaries)
        # to fit v7x's 64 MiB VMEM comfortably.
        row_bytes = L * H * itemsize
        tgt_rows = max(1, (8 * 1024 * 1024) // row_bytes)
        if tgt_rows >= B:
            if B >= 2 * sub:
                # Keep >= 2 grid blocks so both v7x TensorCores get work.
                block_b = pl.cdiv(pl.cdiv(B, 2), sub) * sub
            else:
                block_b = B
        else:
            block_b = max(sub, (tgt_rows // sub) * sub)
    block_b = min(block_b, B)
    nb = pl.cdiv(B, block_b)

    # VMEM budget: double-buffered x tile + elementwise f32 temporaries
    # (tanh output / product before the lane reduce) + double-buffered output.
    x_tile_bytes = block_b * L * H * itemsize
    tmp_bytes = 2 * block_b * L * H * 4
    out_bytes = 2 * block_b * L * itemsize
    vmem_budget = int(1.25 * (2 * x_tile_bytes + tmp_bytes + out_bytes)) + (H * 4)
    vmem_limit = min(56 * 1024 * 1024, max(32 * 1024 * 1024, vmem_budget))

    scores = pl.pallas_call(
        attn_kernel,
        out_shape=jax.ShapeDtypeStruct((B, L), x.dtype),
        grid=(nb,),
        in_specs=[
            pl.BlockSpec((block_b, L, H), lambda i: (i, 0, 0)),   # x tile (VMEM)
            pl.BlockSpec((1, 1, H), lambda i: (0, 0, 0)),         # weight row (VMEM)
        ],
        out_specs=pl.BlockSpec((block_b, L), lambda i: (i, 0)),
        compiler_params=pltpu.CompilerParams(
            dimension_semantics=("parallel",),       # batch tiles across TCs
            vmem_limit_bytes=vmem_limit,
        ),
    )(x, w_row)

    # PyTorch: .unsqueeze(1)
    return scores[:, None, :]


def attn_reference(x, w, b):
    xt = jnp.tanh(x)
    s = jnp.einsum("blh,oh->blo", xt, w)[..., 0] + b.reshape(())
    return jax.nn.softmax(s, axis=1)[:, None, :]


if __name__ == "__main__":
    batch, max_len, hidden = 2, 8, 32

    key = jax.random.PRNGKey(0)
    kx, kw, kb = jax.random.split(key, 3)

    x = jax.random.normal(kx, (batch, max_len, hidden), dtype=jnp.float32)
    # Deterministic init for nn.Linear(hidden_size, 1): weight (1, H), bias (1,)
    bound = 1.0 / (hidden ** 0.5)
    w = jax.random.uniform(kw, (1, hidden), dtype=jnp.float32,
                           minval=-bound, maxval=bound)
    b = jax.random.uniform(kb, (1, 1), dtype=jnp.float32,
                           minval=-bound, maxval=bound)

    alpha = attn_forward(x, w, b)
    jax.block_until_ready(alpha)

    ref = attn_reference(x, w, b)
    assert alpha.shape == (batch, 1, max_len), alpha.shape
    assert jnp.allclose(alpha, ref, atol=1e-5, rtol=1e-5), "mismatch vs reference"
    # attention rows must sum to 1 (exact reciprocal in the finalize)
    assert jnp.allclose(jnp.sum(alpha, axis=-1), 1.0, atol=1e-5), "rows not normalized"

    print("KERNEL_OK")
</pallas_src>

<mosaic_0001>
module attributes {stable_mosaic.version = 11 : i64} {
  func.func @attn_kernel(%arg0: i32, %arg1: memref<2x8x32xf32, #tpu.memory_space<vmem>>, %arg2: memref<1x1x32xf32, #tpu.memory_space<vmem>>, %arg3: memref<2x8xf32, #tpu.memory_space<vmem>>) attributes {dimension_semantics = [#tpu.dimension_semantics<parallel>], iteration_bounds = array<i64: 1>, scalar_prefetch = 0 : i64, scratch_operands = 0 : i64, tpu.core_type = #tpu.core_type<tc>, window_params = [{transform_indices = @transform_0, window_bounds = array<i64: 2, 8, 32>}, {pipeline_mode = #tpu.pipeline_mode<synchronous>, transform_indices = @transform_1, window_bounds = array<i64: 1, 1, 32>}, {transform_indices = @transform_2, window_bounds = array<i64: 2, 8>}]} {
    %c0 = arith.constant 0 : index
    %c0_0 = arith.constant 0 : index
    %c0_1 = arith.constant 0 : index
    %0 = vector.load %arg1[%c0, %c0_0, %c0_1] : memref<2x8x32xf32, #tpu.memory_space<vmem>>, vector<2x8x32xf32>
    %1 = math.tanh %0 : vector<2x8x32xf32>
    %c0_2 = arith.constant 0 : index
    %c0_3 = arith.constant 0 : index
    %c0_4 = arith.constant 0 : index
    %2 = vector.load %arg2[%c0_2, %c0_3, %c0_4] : memref<1x1x32xf32, #tpu.memory_space<vmem>>, vector<1x1x32xf32>
    %3 = vector.broadcast %2 : vector<1x1x32xf32> to vector<2x8x32xf32>
    %4 = arith.mulf %1, %3 : vector<2x8x32xf32>
    %cst = arith.constant dense<0.000000e+00> : vector<2x8xf32>
    %5 = vector.multi_reduction <add>, %4, %cst [2] : vector<2x8x32xf32> to vector<2x8xf32>
    %cst_5 = arith.constant dense<0xFF800000> : vector<2xf32>
    %6 = vector.multi_reduction <maximumf>, %5, %cst_5 [1] : vector<2x8xf32> to vector<2xf32>
    %7 = vector.shape_cast %6 : vector<2xf32> to vector<2x1xf32>
    %8 = vector.broadcast %7 : vector<2x1xf32> to vector<2x8xf32>
    %9 = arith.subf %5, %8 : vector<2x8xf32>
    %10 = math.exp %9 : vector<2x8xf32>
    %cst_6 = arith.constant dense<0.000000e+00> : vector<2xf32>
    %11 = vector.multi_reduction <add>, %10, %cst_6 [1] : vector<2x8xf32> to vector<2xf32>
    %12 = vector.shape_cast %11 : vector<2xf32> to vector<2x1xf32>
    %13 = tpu.reciprocal %12 : vector<2x1xf32> -> vector<2x1xf32>
    %14 = vector.broadcast %13 : vector<2x1xf32> to vector<2x8xf32>
    %15 = arith.mulf %10, %14 : vector<2x8xf32>
    %c0_7 = arith.constant 0 : index
    %c0_8 = arith.constant 0 : index
    %16 = vector.load %arg3[%c0_7, %c0_8] : memref<2x8xf32, #tpu.memory_space<vmem>>, vector<2x8xf32>
    tpu.vector_store %arg3[%c0_7, %c0_8], %15 {strides = array<i32>} : memref<2x8xf32, #tpu.memory_space<vmem>>, vector<2x8xf32>,
    return
  }
  func.func @transform_0(%arg0: i32) -> (i32, i32, i32) {
    %c0_i32 = arith.constant 0 : i32
    %c0_i32_0 = arith.constant 0 : i32
    %c0_i32_1 = arith.constant 0 : i32
    return %arg0, %c0_i32, %c0_i32_0 : i32, i32, i32
  }
  func.func @transform_1(%arg0: i32) -> (i32, i32, i32) {
    %c0_i32 = arith.constant 0 : i32
    %c0_i32_0 = arith.constant 0 : i32
    %c0_i32_1 = arith.constant 0 : i32
    %c0_i32_2 = arith.constant 0 : i32
    return %c0_i32, %c0_i32_0, %c0_i32_1 : i32, i32, i32
  }
  func.func @transform_2(%arg0: i32) -> (i32, i32) {
    %c0_i32 = arith.constant 0 : i32
    %c0_i32_0 = arith.constant 0 : i32
    return %arg0, %c0_i32 : i32, i32
  }
}

</mosaic_0001>

<llo_original>
// kernel: tpu_custom_call.1
$region0: #{tpu_custom_call.1}
  #allocation0 [shape = 'u32[]', space=smem, size = 0x4, offset = 0x4, fixed_abs, tag = 'smem constant byte address 0x4 - core index']
  #allocation1 [shape = 'u32[72,128]{1,0:T(1,128)}', space=vmem, size = 0x9000, scoped, tag = 'internal scratch']
  %s0 = inlined_call_operand.hbm [shape: f32[2,8,32], index: 0, kind: input, shape index: {}]
  %s1 = inlined_call_operand.hbm [shape: f32[1,1,32], index: 1, kind: input, shape index: {}]
  %s2 = inlined_call_operand.hbm [shape: f32[2,8], index: 2, kind: output, shape index: {}]
  %s3 = sld [smem:[#allocation0]]
  $region26: #{tpu_custom_call.1} parent=0
    _
  %s5 = ssub.s32 1, %s3
  %s6 = scalar_select 0, %s5, %s3
  $region1: #{tpu_custom_call.1} parent=0
    #allocation2 [shape = 'u8[8192]{0}', space=vmem, size = 0x2000, scoped, tag = 'input window, operand 0, single buffered']
    #allocation3 [shape = 's32[1]{0}', space=sflag, size = 0x4, scoped, tag = 'scoped memory for tpu_custom_call.1']
    #allocation4 [shape = 's32[1]{0}', space=sflag, size = 0x4, scoped, tag = 'scoped memory for tpu_custom_call.1']
    #allocation5 [shape = 'u8[512]{0}', space=vmem, size = 0x400, scoped, tag = 'input window, operand 1, single buffered']
    #allocation6 [shape = 's32[1]{0}', space=sflag, size = 0x4, scoped, tag = 'scoped memory for tpu_custom_call.1']
    #allocation7 [shape = 'u8[1024]{0}', space=vmem, size = 0x400, scoped, tag = 'output window, operand 0, single buffered']
    %7 = vsyncpa [#allocation3], 0
    %8 = vsyncpa [#allocation6], 0
    %9 = vsyncpa [#allocation4], 0
    // Predicated region
    $region2: #{tpu_custom_call.1} parent=1 // pred_check
      _
    $region3: #{tpu_custom_call.1} parent=1 // pred_check_branch
      %11 = sbr.rel (0) target = $region5
    $region4: #{tpu_custom_call.1} parent=1 // pred_region
      %13 = vsyncadd [#allocation3], 0
      %s14 = sshll.u32 %s0, 4
      %s15 = int_to_ptr.hbm [resolvable:$true] %s14
      %s16 = sshll.u32 [#allocation2], 4
      %s17 = int_to_ptr.vmem [resolvable:$true] %s16
      %22 = dma.hbm_to_vmem [thread:$0]  %s15, 256, %s17, [#allocation3], 128, 128, 8
    $region5: #{tpu_custom_call.1} parent=1 // pred_fallthru
      _
    // Predicated region
    $region6: #{tpu_custom_call.1} parent=1 // pred_check
      _
    $region7: #{tpu_custom_call.1} parent=1 // pred_check_branch
      %24 = sbr.rel (0) target = $region9
    $region8: #{tpu_custom_call.1} parent=1 // pred_region
      %26 = vsyncadd [#allocation6], 0
      %s28 = sshll.u32 %s1, 4
      %s29 = int_to_ptr.hbm [resolvable:$true] %s28
      %s30 = sshll.u32 [#allocation5], 4
      %s31 = int_to_ptr.vmem [resolvable:$true] %s30
      %33 = dma.hbm_to_vmem [thread:$0]  %s29, 16, %s31, [#allocation6]
    $region9: #{tpu_custom_call.1} parent=1 // pred_fallthru
      _
    // Predicated region
    $region10: #{tpu_custom_call.1} parent=1 // pred_check
      _
    $region11: #{tpu_custom_call.1} parent=1 // pred_check_branch
      %35 = sbr.rel (0) target = $region13
    $region12: #{tpu_custom_call.1} parent=1 // pred_region
      %37 = dma.done [#allocation3], 256
    $region13: #{tpu_custom_call.1} parent=1 // pred_fallthru
      _
    // Predicated region
    $region14: #{tpu_custom_call.1} parent=1 // pred_check
      _
    $region15: #{tpu_custom_call.1} parent=1 // pred_check_branch
      %39 = sbr.rel (0) target = $region17
    $region16: #{tpu_custom_call.1} parent=1 // pred_region
      %41 = dma.done [#allocation6], 16
    $region17: #{tpu_custom_call.1} parent=1 // pred_fallthru
      _
    %v42 = vld [vmem:[#allocation2] sm:$0xff]
    %v43 = vld [vmem:[#allocation2 + $0x8] sm:$0xff]
    %v44 = vtanh.pop %v42
    %v45 = vtanh.pop %v43
    %v46 = vld [vmem:[#allocation5] sm:$0x1]
    %v48 = vperm.slane %v46, 0
    %v50 = vmul.f32 %v44, %v48
    %v51 = vmul.f32 %v45, %v48
    %vm52 = vcmask 261120
    %v53 = vsel %vm52, %v50, 0.0
    %54 = vadd.xlane.f32.xlu0 %v53
    %v55 = vpop.xlane.xlu0 %54
    %v56 = vsel %vm52, %v51, 0.0
    %57 = vadd.xlane.f32.xlu0 %v56
    %v58 = vpop.xlane.xlu0 %57
    %v61 = vlaneseq
    %v62 = vand.u32 %v61, 127
    %v63 = vperm.slane %v55, %v62
    %v64 = vperm.slane %v58, %v62
    %vm65 = vcmask 1041409
    %v66 = vsel %vm65, %v64, %v63
    %vm68 = vcmask 58368
    %v69 = vsel %vm68, %v66, -inf
    %70 = vmax.xlane.f32.xlu0 %v69
    %v71 = vpop.xlane.xlu0 %70
    %v73 = vperm.slane %v71, 0
    %v74 = vperm.slane %v71, 1
    %v77 = vsub.f32 %v55, %v73
    %v78 = vsub.f32 %v58, %v74
    %v79 = vmul.f32 %v77, 1.442695
    %v80 = vpow.pop %v79
    %v81 = vmul.f32 %v78, 1.442695
    %v82 = vpow.pop %v81
    %85 = vset.pattern.permute.xlu0 0
    %86 = vperm.xlu0 %85, %v80
    %v87 = vpop.permute.xlu0 %86
    %88 = vset.pattern.permute.xlu0 0
    %89 = vperm.xlu0 %88, %v82
    %v90 = vpop.permute.xlu0 %89
    %v91 = vperm.slane %v87, %v62
    %v92 = vperm.slane %v90, %v62
    %v93 = vsel %vm65, %v92, %v91
    %v95 = vsel %vm68, %v93, 0.0
    %96 = vadd.xlane.f32.xlu0 %v95
    %v97 = vpop.xlane.xlu0 %96
    %v98 = vrcp.pop %v97
    %v99 = vmul.f32 %v97, %v98
    %v100 = vsub.f32 1.0, %v99
    %v101 = vmul.f32 %v98, %v100
    %v102 = vadd.f32 %v98, %v101
    %vm103 = vweird.f32 %v97
    %vm104 = vweird.f32 %v98
    %vm105 = vmor %vm103, %vm104
    %v106 = vsel %vm105, %v98, %v102
    %v107 = vand.u32 2147483647, %v97
    %vm108 = vcmp.eq.f32.partialorder %v107, 8.507059e+37
    %v109 = vand.u32 %v97, 2147483648
    %v110 = vor.u32 1.1754944e-38, %v109
    %v111 = vsel %vm108, %v110, %v106
    %v113 = vperm.slane %v111, 0
    %v114 = vperm.slane %v111, 1
    %v117 = vmul.f32 %v80, %v113
    %v118 = vmul.f32 %v82, %v114
    %121 = vset.pattern.permute.xlu0 0
    %122 = vperm.xlu0 %121, %v117
    %v123 = vpop.permute.xlu0 %122
    %124 = vset.pattern.permute.xlu0 0
    %125 = vperm.xlu0 %124, %v118
    %v126 = vpop.permute.xlu0 %125
    %v127 = vperm.slane %v123, %v62
    %v128 = vperm.slane %v126, %v62
    %v129 = vsel %vm65, %v128, %v127
    %131 = vst.msk [vmem:[#allocation7] sm:$0x3] %vm68, %v129
    // Predicated region
    $region18: #{tpu_custom_call.1} parent=1 // pred_check
      _
    $region19: #{tpu_custom_call.1} parent=1 // pred_check_branch
      %133 = sbr.rel (0) target = $region21
    $region20: #{tpu_custom_call.1} parent=1 // pred_region
      %135 = vsyncadd [#allocation4], 0
      %s137 = sshll.u32 [#allocation7], 4
      %s138 = int_to_ptr.vmem [resolvable:$true] %s137
      %s139 = sshll.u32 %s2, 4
      %s140 = int_to_ptr.hbm [resolvable:$true] %s139
      %142 = dma.vmem_to_hbm [thread:$0]  %s138, 32, %s140, [#allocation4]
    $region21: #{tpu_custom_call.1} parent=1 // pred_fallthru
      _
    // Predicated region
    $region22: #{tpu_custom_call.1} parent=1 // pred_check
      _
    $region23: #{tpu_custom_call.1} parent=1 // pred_check_branch
      %144 = sbr.rel (0) target = $region25
    $region24: #{tpu_custom_call.1} parent=1 // pred_region
      %146 = dma.done [#allocation4], 32
    $region25: #{tpu_custom_call.1} parent=1 // pred_fallthru
      _
    %147 = vsyncpa [#allocation3], 1
    %148 = vsyncpa [#allocation6], 1
    %149 = vsyncpa [#allocation4], 1

</llo_original>
